<compile_context>
chip_gen: v7x
topology: tpu7x:2x2x1
jax: 0.10.0
libtpu: 0.0.40
codegen_flags: <defaults>
</compile_context>

<pallas_src>
import jax
import jax.numpy as jnp
from jax.experimental import pallas as pl
from jax.experimental.pallas import tpu as pltpu


# ----------------------------- Pallas kernel --------------------------------
def _sigmoid(x):
    # sigmoid(x) = 0.5*(tanh(x/2)+1): numerically safe, runs on the EUP slot.
    return 0.5 * (jnp.tanh(0.5 * x) + 1.0)


def _sa_gated_kernel(sl_ref, prel_ref, tmpg_ref, wls_ref, out_ref):
    """Per-tile hot path.

    sl_ref   : (tile_t, D)   real part of the FFT for one (batch, time-tile)
    prel_ref : (1, D)        hoisted per-batch term  h @ Wl_h + b_l
    tmpg_ref : (1, D)        hoisted per-batch term  sigmoid(tanh(.)) * s_g
    wls_ref  : (D, D)        s_l half of attn_l weight (transposed), resident
    out_ref  : (tile_t, 3D)  [alpha_l | tmp_l | new_real]
    """
    s_l = sl_ref[...]
    d = s_l.shape[-1]

    energy_l = jnp.tanh(
        jnp.dot(s_l, wls_ref[...], preferred_element_type=jnp.float32)
        + prel_ref[...]
    )
    alpha_l = _sigmoid(energy_l)
    tmp_l = alpha_l * s_l

    out_ref[:, :d] = alpha_l
    out_ref[:, d:2 * d] = tmp_l
    out_ref[:, 2 * d:] = tmp_l + tmpg_ref[...]


def _choose_time_tile(T_f):
    """Biggest legal time tile: full axis if small, else a /8 divisor <= 512."""
    if T_f <= 512:
        return T_f
    for t in range(512, 7, -1):
        if T_f % t == 0 and t % 8 == 0:
            return t
    return T_f


def _run_sa_gated(s_l, pre_l, tmp_g, wls):
    B, T_f, D = s_l.shape
    tile_t = _choose_time_tile(T_f)
    grid = (B, T_f // tile_t)

    return pl.pallas_call(
        _sa_gated_kernel,
        out_shape=jax.ShapeDtypeStruct((B, T_f, 3 * D), jnp.float32),
        grid_spec=pltpu.PrefetchScalarGridSpec(
            num_scalar_prefetch=0,
            grid=grid,
            in_specs=[
                # s_l tile for this (batch, time-tile)
                pl.BlockSpec((None, tile_t, D), lambda b, t: (b, t, 0)),
                # per-batch hoisted rows, broadcast over the tile
                pl.BlockSpec((None, 1, D), lambda b, t: (b, 0, 0)),
                pl.BlockSpec((None, 1, D), lambda b, t: (b, 0, 0)),
                # weight: constant index_map -> VMEM-resident across the grid
                pl.BlockSpec((D, D), lambda b, t: (0, 0)),
            ],
            out_specs=pl.BlockSpec((None, tile_t, 3 * D), lambda b, t: (b, t, 0)),
        ),
        compiler_params=pltpu.CompilerParams(
            dimension_semantics=("parallel", "parallel"),
        ),
    )(
        s_l.astype(jnp.float32),
        pre_l.reshape(B, 1, D).astype(jnp.float32),
        tmp_g.reshape(B, 1, D).astype(jnp.float32),
        wls.astype(jnp.float32),
    )


# ----------------------------- parameter setup -------------------------------
def init_params(key, lstm_dim, FFT_dim):
    """Raw nn.Linear-shaped weights (weight: (out, in)), deterministic init."""
    D, F = lstm_dim, FFT_dim
    ks = jax.random.split(key, 6)

    def unif(k, shape, fan_in):
        bound = 1.0 / jnp.sqrt(float(fan_in))
        return jax.random.uniform(k, shape, jnp.float32, -bound, bound)

    return {
        "W_l": unif(ks[0], (D, 2 * D), 2 * D),     # attn_l: Linear(2D, D)
        "b_l": unif(ks[1], (D,), 2 * D),
        "W_gdc": unif(ks[2], (D, F), F),           # attn_g_dim_change: Linear(F, D)
        "b_gdc": unif(ks[3], (D,), F),
        "W_g": unif(ks[4], (D, 2 * D), 2 * D),     # attn_g: Linear(2D, D)
        "b_g": unif(ks[5], (D,), 2 * D),
    }


# ----------------------------- forward (glue + kernel) -----------------------
def sa_module_forward(h, PSD, H, params, *, T_f, FFT_dim, lstm_dim):
    T_h, B, D = H.shape
    assert D == lstm_dim and PSD.shape == (FFT_dim,)

    W_l, b_l = params["W_l"], params["b_l"]
    W_gdc, b_gdc = params["W_gdc"], params["b_gdc"]
    W_g, b_g = params["W_g"], params["b_g"]

    # H_padd = F.pad(H.permute(1,-1,0), (T_f - T_h, 0)).permute(-1,0,1)
    #  == zero-pad at the *front* of the time axis -> (T_f, B, D)
    H_padd = jnp.pad(H.astype(jnp.float32), ((T_f - T_h, 0), (0, 0), (0, 0)))

    # TODO(synk): torch.rfft/torch.ifft (full 3-D FFT, mixing the batch axis like
    # the original module) has no Pallas TPU equivalent; computed with jnp.fft.
    fft = jnp.fft.fftn(H_padd, axes=(0, 1, 2))                          # complex64
    fft_orig = jnp.stack([jnp.real(fft), jnp.imag(fft)], axis=-1)       # (T_f,B,D,2)

    s_l = jnp.transpose(jnp.real(fft), (1, 0, 2))                       # (B, T_f, D)

    # ---- hoisted terms: O(B*D) work computed once, not O(B*T_f*D) ----------
    hf = h.astype(jnp.float32)
    # attn_l(cat(h, s_l)) = h @ W_l[:, :D].T + s_l @ W_l[:, D:].T + b_l
    pre_l = hf @ W_l[:, :D].T + b_l                                     # (B, D)
    # s_g row (identical for every (batch, time) position)
    s_g = PSD.astype(jnp.float32) @ W_gdc.T + b_gdc                     # (D,)
    # the whole global branch depends only on h and s_g -> per-batch constant
    energy_g = jnp.tanh(hf @ W_g[:, :D].T + s_g @ W_g[:, D:].T + b_g)   # (B, D)
    tmp_g = jax.nn.sigmoid(energy_g) * s_g                              # (B, D)

    # ---- Pallas hot path over the N = B*T_f rows ----------------------------
    wls = W_l[:, D:].T                                                  # (D, D)
    combined = _run_sa_gated(s_l, pre_l, tmp_g, wls)                    # (B,T_f,3D)
    alpha_l = combined[..., :D]
    tmp_l = combined[..., D:2 * D]
    new_real = combined[..., 2 * D:]

    # fft[:, :, :, 0] = tmp_l + tmp_g   (permuted back to (T_f, B, D))
    fft_new = jnp.transpose(new_real, (1, 0, 2)) + 1j * jnp.imag(fft)
    ifft = jnp.fft.ifftn(fft_new, axes=(0, 1, 2))
    H_filtered = jnp.real(ifft)                                         # (T_f, B, D)
    h_t_filtered = H_filtered[-1, :, :]                                 # (B, D)

    return (
        h_t_filtered,
        H_filtered,                                                     # torch returns .numpy(); jnp array here
        jnp.transpose(alpha_l, (0, 2, 1)),                              # (B, D, T_f)
        fft_orig,                                                       # (T_f, B, D, 2)
        jnp.transpose(tmp_l, (0, 2, 1)),                                # (B, D, T_f)
    )


# ----------------------------- pure-JAX reference ----------------------------
def _sa_forward_reference(h, PSD, H, params, *, T_f, FFT_dim, lstm_dim):
    """Un-hoisted mirror of the PyTorch forward, for correctness checking."""
    T_h, B, D = H.shape
    W_l, b_l = params["W_l"], params["b_l"]
    W_gdc, b_gdc = params["W_gdc"], params["b_gdc"]
    W_g, b_g = params["W_g"], params["b_g"]

    H_padd = jnp.pad(H.astype(jnp.float32), ((T_f - T_h, 0), (0, 0), (0, 0)))
    fft = jnp.fft.fftn(H_padd, axes=(0, 1, 2))
    fft_orig = jnp.stack([jnp.real(fft), jnp.imag(fft)], axis=-1)

    h_rep = jnp.broadcast_to(h[:, None, :], (B, T_f, D)).astype(jnp.float32)
    s_l = jnp.transpose(jnp.real(fft), (1, 0, 2))
    energy_l = jnp.tanh(jnp.concatenate([h_rep, s_l], axis=2) @ W_l.T + b_l)
    alpha_l = jax.nn.sigmoid(energy_l)
    tmp_l = alpha_l * s_l

    s_g = jnp.broadcast_to(PSD[None, None, :], (B, T_f, FFT_dim)).astype(jnp.float32)
    s_g = s_g @ W_gdc.T + b_gdc
    energy_g = jnp.tanh(jnp.concatenate([h_rep, s_g], axis=2) @ W_g.T + b_g)
    alpha_g = jax.nn.sigmoid(energy_g)
    tmp_g = alpha_g * s_g

    new_real = jnp.transpose(tmp_l + tmp_g, (1, 0, 2))
    ifft = jnp.fft.ifftn(new_real + 1j * jnp.imag(fft), axes=(0, 1, 2))
    H_filtered = jnp.real(ifft)
    return (H_filtered[-1], H_filtered, jnp.transpose(alpha_l, (0, 2, 1)),
            fft_orig, jnp.transpose(tmp_l, (0, 2, 1)))


# ----------------------------------- main ------------------------------------
if __name__ == "__main__":
    lstm_dim = 32
    T_f = 16
    FFT_dim = 64
    B = 2
    T_h = 8   # H shorter than T_f -> exercises the front zero-padding

    key = jax.random.PRNGKey(0)
    k_h, k_psd, k_H, k_params = jax.random.split(key, 4)

    h = jax.random.normal(k_h, (B, lstm_dim), jnp.float32)
    PSD = jax.random.normal(k_psd, (FFT_dim,), jnp.float32)
    H = jax.random.normal(k_H, (T_h, B, lstm_dim), jnp.float32)
    params = init_params(k_params, lstm_dim, FFT_dim)

    outs = sa_module_forward(h, PSD, H, params,
                             T_f=T_f, FFT_dim=FFT_dim, lstm_dim=lstm_dim)
    outs = jax.block_until_ready(outs)

    h_t_filtered, H_filtered, alpha_l_p, fft_orig, tmp_l_p = outs
    assert h_t_filtered.shape == (B, lstm_dim)
    assert H_filtered.shape == (T_f, B, lstm_dim)
    assert alpha_l_p.shape == (B, lstm_dim, T_f)
    assert fft_orig.shape == (T_f, B, lstm_dim, 2)
    assert tmp_l_p.shape == (B, lstm_dim, T_f)

    # correctness check of the hoisted + fused Pallas path vs. pure-JAX reference
    refs = _sa_forward_reference(h, PSD, H, params,
                                 T_f=T_f, FFT_dim=FFT_dim, lstm_dim=lstm_dim)
    refs = jax.block_until_ready(refs)
    for got, ref in zip(outs, refs):
        assert jnp.allclose(got, ref, atol=2e-3, rtol=2e-3), "mismatch vs reference"

    print("KERNEL_OK")
</pallas_src>

<mosaic_0001>
module attributes {stable_mosaic.version = 11 : i64} {
  func.func @_sa_gated_kernel(%arg0: i32, %arg1: i32, %arg2: memref<1x16x32xf32, #tpu.memory_space<vmem>>, %arg3: memref<1x1x32xf32, #tpu.memory_space<vmem>>, %arg4: memref<1x1x32xf32, #tpu.memory_space<vmem>>, %arg5: memref<32x32xf32, #tpu.memory_space<vmem>>, %arg6: memref<1x16x96xf32, #tpu.memory_space<vmem>>) attributes {dimension_semantics = [#tpu.dimension_semantics<parallel>, #tpu.dimension_semantics<parallel>], iteration_bounds = array<i64: 2, 1>, scalar_prefetch = 0 : i64, scratch_operands = 0 : i64, tpu.core_type = #tpu.core_type<tc>, window_params = [{transform_indices = @transform_0, window_bounds = array<i64: 1, 16, 32>}, {transform_indices = @transform_1, window_bounds = array<i64: 1, 1, 32>}, {transform_indices = @transform_2, window_bounds = array<i64: 1, 1, 32>}, {pipeline_mode = #tpu.pipeline_mode<synchronous>, transform_indices = @transform_3, window_bounds = array<i64: 32, 32>}, {transform_indices = @transform_4, window_bounds = array<i64: 1, 16, 96>}]} {
    %c0 = arith.constant 0 : index
    %c0_0 = arith.constant 0 : index
    %c0_1 = arith.constant 0 : index
    %0 = vector.load %arg2[%c0, %c0_0, %c0_1] : memref<1x16x32xf32, #tpu.memory_space<vmem>>, vector<1x16x32xf32>
    %1 = vector.shape_cast %0 : vector<1x16x32xf32> to vector<16x32xf32>
    %c0_2 = arith.constant 0 : index
    %c0_3 = arith.constant 0 : index
    %2 = vector.load %arg5[%c0_2, %c0_3] : memref<32x32xf32, #tpu.memory_space<vmem>>, vector<32x32xf32>
    %cst = arith.constant dense<0.000000e+00> : vector<16x32xf32>
    %3 = tpu.matmul %1, %2, %cst {dimension_numbers = #tpu.dot_dimension_numbers<[1], [0], [0], [1], [0, 0, 1, 1], [], []>} : vector<16x32xf32>, vector<32x32xf32>, vector<16x32xf32> -> vector<16x32xf32>
    %c0_4 = arith.constant 0 : index
    %c0_5 = arith.constant 0 : index
    %c0_6 = arith.constant 0 : index
    %4 = vector.load %arg3[%c0_4, %c0_5, %c0_6] : memref<1x1x32xf32, #tpu.memory_space<vmem>>, vector<1x1x32xf32>
    %5 = vector.shape_cast %4 : vector<1x1x32xf32> to vector<1x32xf32>
    %6 = vector.broadcast %5 : vector<1x32xf32> to vector<16x32xf32>
    %7 = arith.addf %3, %6 : vector<16x32xf32>
    %8 = math.tanh %7 : vector<16x32xf32>
    %cst_7 = arith.constant 5.000000e-01 : f32
    %9 = vector.broadcast %cst_7 : f32 to vector<16x32xf32>
    %10 = arith.mulf %9, %8 : vector<16x32xf32>
    %11 = math.tanh %10 : vector<16x32xf32>
    %cst_8 = arith.constant 1.000000e+00 : f32
    %12 = vector.broadcast %cst_8 : f32 to vector<16x32xf32>
    %13 = arith.addf %11, %12 : vector<16x32xf32>
    %cst_9 = arith.constant 5.000000e-01 : f32
    %14 = vector.broadcast %cst_9 : f32 to vector<16x32xf32>
    %15 = arith.mulf %14, %13 : vector<16x32xf32>
    %16 = arith.mulf %15, %1 : vector<16x32xf32>
    %c0_10 = arith.constant 0 : index
    %c0_11 = arith.constant 0 : index
    %c0_12 = arith.constant 0 : index
    %17 = vector.load %arg6[%c0_10, %c0_11, %c0_12] : memref<1x16x96xf32, #tpu.memory_space<vmem>>, vector<1x16x32xf32>
    %18 = vector.shape_cast %17 : vector<1x16x32xf32> to vector<16x32xf32>
    %19 = vector.shape_cast %15 : vector<16x32xf32> to vector<1x16x32xf32>
    tpu.vector_store %arg6[%c0_10, %c0_11, %c0_12], %19 {strides = array<i32>} : memref<1x16x96xf32, #tpu.memory_space<vmem>>, vector<1x16x32xf32>,
    %c0_13 = arith.constant 0 : index
    %c0_14 = arith.constant 0 : index
    %c32 = arith.constant 32 : index
    %20 = vector.load %arg6[%c0_13, %c0_14, %c32] : memref<1x16x96xf32, #tpu.memory_space<vmem>>, vector<1x16x32xf32>
    %21 = vector.shape_cast %20 : vector<1x16x32xf32> to vector<16x32xf32>
    %22 = vector.shape_cast %16 : vector<16x32xf32> to vector<1x16x32xf32>
    tpu.vector_store %arg6[%c0_13, %c0_14, %c32], %22 {strides = array<i32>} : memref<1x16x96xf32, #tpu.memory_space<vmem>>, vector<1x16x32xf32>,
    %c0_15 = arith.constant 0 : index
    %c0_16 = arith.constant 0 : index
    %c0_17 = arith.constant 0 : index
    %23 = vector.load %arg4[%c0_15, %c0_16, %c0_17] : memref<1x1x32xf32, #tpu.memory_space<vmem>>, vector<1x1x32xf32>
    %24 = vector.shape_cast %23 : vector<1x1x32xf32> to vector<1x32xf32>
    %25 = vector.broadcast %24 : vector<1x32xf32> to vector<16x32xf32>
    %26 = arith.addf %16, %25 : vector<16x32xf32>
    %c0_18 = arith.constant 0 : index
    %c0_19 = arith.constant 0 : index
    %c64 = arith.constant 64 : index
    %27 = vector.load %arg6[%c0_18, %c0_19, %c64] : memref<1x16x96xf32, #tpu.memory_space<vmem>>, vector<1x16x32xf32>
    %28 = vector.shape_cast %27 : vector<1x16x32xf32> to vector<16x32xf32>
    %29 = vector.shape_cast %26 : vector<16x32xf32> to vector<1x16x32xf32>
    tpu.vector_store %arg6[%c0_18, %c0_19, %c64], %29 {strides = array<i32>} : memref<1x16x96xf32, #tpu.memory_space<vmem>>, vector<1x16x32xf32>,
    return
  }
  func.func @transform_0(%arg0: i32, %arg1: i32) -> (i32, i32, i32) {
    %c0_i32 = arith.constant 0 : i32
    %c0_i32_0 = arith.constant 0 : i32
    return %arg0, %arg1, %c0_i32 : i32, i32, i32
  }
  func.func @transform_1(%arg0: i32, %arg1: i32) -> (i32, i32, i32) {
    %c0_i32 = arith.constant 0 : i32
    %c0_i32_0 = arith.constant 0 : i32
    %c0_i32_1 = arith.constant 0 : i32
    return %arg0, %c0_i32, %c0_i32_0 : i32, i32, i32
  }
  func.func @transform_2(%arg0: i32, %arg1: i32) -> (i32, i32, i32) {
    %c0_i32 = arith.constant 0 : i32
    %c0_i32_0 = arith.constant 0 : i32
    %c0_i32_1 = arith.constant 0 : i32
    return %arg0, %c0_i32, %c0_i32_0 : i32, i32, i32
  }
  func.func @transform_3(%arg0: i32, %arg1: i32) -> (i32, i32) {
    %c0_i32 = arith.constant 0 : i32
    %c0_i32_0 = arith.constant 0 : i32
    %c0_i32_1 = arith.constant 0 : i32
    return %c0_i32, %c0_i32_0 : i32, i32
  }
  func.func @transform_4(%arg0: i32, %arg1: i32) -> (i32, i32, i32) {
    %c0_i32 = arith.constant 0 : i32
    %c0_i32_0 = arith.constant 0 : i32
    return %arg0, %arg1, %c0_i32 : i32, i32, i32
  }
}

</mosaic_0001>

<llo_original>
// kernel: tpu_custom_call.1
$region0: #{tpu_custom_call.1}
  #allocation0 [shape = 'u32[]', space=smem, size = 0x4, offset = 0x4, fixed_abs, tag = 'smem constant byte address 0x4 - core index']
  #allocation1 [shape = 'u32[144,128]{1,0:T(1,128)}', space=vmem, size = 0x12000, scoped, tag = 'internal scratch']
  %s0 = inlined_call_operand.hbm [shape: f32[2,16,32], index: 0, kind: input, shape index: {}]
  %s1 = inlined_call_operand.vmem [shape: f32[2,1,32], index: 1, kind: input, shape index: {}]
  %s2 = inlined_call_operand.vmem [shape: f32[2,1,32], index: 2, kind: input, shape index: {}]
  %s3 = inlined_call_operand.hbm [shape: f32[32,32], index: 3, kind: input, shape index: {}]
  %s4 = inlined_call_operand.hbm [shape: f32[2,16,96], index: 4, kind: output, shape index: {}]
  %s5 = sld [smem:[#allocation0]]
  $region57: #{tpu_custom_call.1} parent=0
    _
  %s7 = ssub.s32 1, %s5
  %s8 = scalar_select 0, %s7, %s5
  $region1: #{tpu_custom_call.1} parent=0
    #allocation2 [shape = 'u8[16384]{0}', space=vmem, size = 0x4000, scoped, tag = 'input window, operand 0']
    #allocation3 [shape = 's32[2]{0}', space=sflag, size = 0x8, scoped, tag = 'scoped memory for tpu_custom_call.1']
    #allocation4 [shape = 's32[2]{0}', space=sflag, size = 0x8, scoped, tag = 'scoped memory for tpu_custom_call.1']
    #allocation5 [shape = 'u8[16384]{0}', space=vmem, size = 0x4000, scoped, tag = 'input window, operand 3, single buffered']
    #allocation6 [shape = 's32[1]{0}', space=sflag, size = 0x4, scoped, tag = 'scoped memory for tpu_custom_call.1']
    #allocation7 [shape = 'u8[16384]{0}', space=vmem, size = 0x4000, scoped, tag = 'output window, operand 0']
    %9 = vsyncpa [#allocation3], 0
    %s10 = scalar_lea.sflag [#allocation3], 1
    %11 = vsyncpa %s10, 0
    %12 = vsyncpa [#allocation6], 0
    %13 = vsyncpa [#allocation4], 0
    %s14 = scalar_lea.sflag [#allocation4], 1
    %15 = vsyncpa %s14, 0
    loop: start=0, step=1, limit=4
    $region2: #{tpu_custom_call.1} parent=1 // loop_pre_header
      _
    $region3: #{tpu_custom_call.1} parent=1 // loop_header
      %s17 = sphi 0, %s21
      %p18 = scmp.ge.s32.totalorder %s17, 4
      %s24 = sphi 0, %s36
      %s25 = sphi 0, %s32
      %s26 = sphi 0, %s24
      %s27 = sphi 0, %s25
      %s28 = sphi 0, %s26
      %s29 = sphi 0, %s27
      %s41 = sphi 0, %s43
      %s44 = sphi 0, %s41
      %s45 = sphi 0, %s44
      %s61 = sphi 0, %s45
      %s67 = sphi 0, %s69
      %s70 = sphi 0, %s67
      %s71 = sphi 0, %s70
      %s87 = sphi 0, %s71
      %s93 = sphi 0, %s95
      %s96 = sphi 0, %s93
      %s97 = sphi 0, %s96
      %s113 = sphi 0, %s97
      %s117 = sphi 0, %s117
      %s119 = sphi 0, %s117
      %s120 = sphi 0, %s119
      %s134 = sphi 0, %s120
      %s142 = sphi 0, %s144
      %s145 = sphi 0, %s142
      %s146 = sphi 0, %s145
      %s162 = sphi 0, %s146
    $region4: #{tpu_custom_call.1} parent=1 // loop_header_branch
      %20 = sbr.rel (%p18) target = $region8
    $region5: #{tpu_custom_call.1} parent=1 // loop_body
      %s22 = ssub.s32 %s17, 1
      %s23 = ssub.s32 %s17, 2
      %s30 = sadd.s32 1, %s25
      %p31 = scmp.ge.s32.totalorder %s30, 1
      %s32 = scalar_select %p31, 0, %s30
      %s33 = sadd.s32 1, %s24
      %s34 = scalar_select %p31, %s33, %s24
      %p35 = scmp.ge.s32.totalorder %s34, 2
      %s36 = scalar_select %p35, 0, %s34
      %s37 = ssub.s32 %s24, %s36
      %s38 = ssub.s32 %s25, %s32
      %s39 = sor.u32 %s37, %s38
      %p40 = scmp.eq.s32.totalorder %s39, 0
      %s42 = sadd.s32 %s41, 1
      %s43 = scalar_select %p40, %s41, %s42
      %p46 = pneg %p40
      %p47 = scmp.eq.s32.totalorder %s17, 1
      %p48 = por %p46, %p47
      %p49 = scmp.ne.s32.totalorder %s41, %s44
      %p50 = scmp.eq.s32.totalorder %s17, 0
      %p51 = por %p49, %p50
      %p52 = scmp.ne.s32.totalorder %s41, %s44
      %p53 = scmp.eq.s32.totalorder %s22, 1
      %p54 = por %p52, %p53
      %p55 = scmp.ne.s32.totalorder %s44, %s45
      %p56 = scmp.eq.s32.totalorder %s22, 0
      %p57 = por %p55, %p56
      %p58 = scmp.ne.s32.totalorder %s44, %s45
      %p59 = scmp.eq.s32.totalorder %s23, 1
      %p60 = por %p58, %p59
      %p62 = scmp.ne.s32.totalorder %s45, %s61
      %p63 = scmp.eq.s32.totalorder %s23, 0
      %p64 = por %p62, %p63
      %s65 = ssub.s32 %s24, %s36
      %p66 = scmp.eq.s32.totalorder %s65, 0
      %s68 = sadd.s32 %s67, 1
      %s69 = scalar_select %p66, %s67, %s68
      %p72 = pneg %p66
      %p73 = scmp.eq.s32.totalorder %s17, 1
      %p74 = por %p72, %p73
      %p75 = scmp.ne.s32.totalorder %s67, %s70
      %p76 = scmp.eq.s32.totalorder %s17, 0
      %p77 = por %p75, %p76
      %p78 = scmp.ne.s32.totalorder %s67, %s70
      %p79 = scmp.eq.s32.totalorder %s22, 1
      %p80 = por %p78, %p79
      %p81 = scmp.ne.s32.totalorder %s70, %s71
      %p82 = scmp.eq.s32.totalorder %s22, 0
      %p83 = por %p81, %p82
      %p84 = scmp.ne.s32.totalorder %s70, %s71
      %p85 = scmp.eq.s32.totalorder %s23, 1
      %p86 = por %p84, %p85
      %p88 = scmp.ne.s32.totalorder %s71, %s87
      %p89 = scmp.eq.s32.totalorder %s23, 0
      %p90 = por %p88, %p89
      %s91 = ssub.s32 %s24, %s36
      %p92 = scmp.eq.s32.totalorder %s91, 0
      %s94 = sadd.s32 %s93, 1
      %s95 = scalar_select %p92, %s93, %s94
      %p98 = pneg %p92
      %p99 = scmp.eq.s32.totalorder %s17, 1
      %p100 = por %p98, %p99
      %p101 = scmp.ne.s32.totalorder %s93, %s96
      %p102 = scmp.eq.s32.totalorder %s17, 0
      %p103 = por %p101, %p102
      %p104 = scmp.ne.s32.totalorder %s93, %s96
      %p105 = scmp.eq.s32.totalorder %s22, 1
      %p106 = por %p104, %p105
      %p107 = scmp.ne.s32.totalorder %s96, %s97
      %p108 = scmp.eq.s32.totalorder %s22, 0
      %p109 = por %p107, %p108
      %p110 = scmp.ne.s32.totalorder %s96, %s97
      %p111 = scmp.eq.s32.totalorder %s23, 1
      %p112 = por %p110, %p111
      %p114 = scmp.ne.s32.totalorder %s97, %s113
      %p115 = scmp.eq.s32.totalorder %s23, 0
      %p116 = por %p114, %p115
      %s118 = sadd.s32 %s117, 1
      %p121 = scmp.eq.s32.totalorder %s17, 1
      %p122 = scmp.ne.s32.totalorder %s117, %s119
      %p123 = scmp.eq.s32.totalorder %s17, 0
      %p124 = por %p122, %p123
      %p125 = scmp.ne.s32.totalorder %s117, %s119
      %p126 = scmp.eq.s32.totalorder %s22, 1
      %p127 = por %p125, %p126
      %p128 = scmp.ne.s32.totalorder %s119, %s120
      %p129 = scmp.eq.s32.totalorder %s22, 0
      %p130 = por %p128, %p129
      %p131 = scmp.ne.s32.totalorder %s119, %s120
      %p132 = scmp.eq.s32.totalorder %s23, 1
      %p133 = por %p131, %p132
      %p135 = scmp.ne.s32.totalorder %s120, %s134
      %p136 = scmp.eq.s32.totalorder %s23, 0
      %p137 = por %p135, %p136
      %s138 = ssub.s32 %s24, %s36
      %s139 = ssub.s32 %s25, %s32
      %s140 = sor.u32 %s138, %s139
      %p141 = scmp.eq.s32.totalorder %s140, 0
      %s143 = sadd.s32 %s142, 1
      %s144 = scalar_select %p141, %s142, %s143
      %p147 = pneg %p141
      %p148 = scmp.eq.s32.totalorder %s17, 1
      %p149 = por %p147, %p148
      %p150 = scmp.ne.s32.totalorder %s142, %s145
      %p151 = scmp.eq.s32.totalorder %s17, 0
      %p152 = por %p150, %p151
      %p153 = scmp.ne.s32.totalorder %s142, %s145
      %p154 = scmp.eq.s32.totalorder %s22, 1
      %p155 = por %p153, %p154
      %p156 = scmp.ne.s32.totalorder %s145, %s146
      %p157 = scmp.eq.s32.totalorder %s22, 0
      %p158 = por %p156, %p157
      %p159 = scmp.ne.s32.totalorder %s145, %s146
      %p160 = scmp.eq.s32.totalorder %s23, 1
      %p161 = por %p159, %p160
      %p163 = scmp.ne.s32.totalorder %s146, %s162
      %p164 = scmp.eq.s32.totalorder %s23, 0
      %p165 = por %p163, %p164
      %p166 = scmp.le.s32.totalorder 1, %s17
      %p167 = scmp.lt.s32.totalorder %s17, 3
      %p168 = pnand %p166, %p167
      %p169 = pneg %p168
      // Predicated region
      $region9: #{tpu_custom_call.1} parent=5 // pred_check
        _
      $region10: #{tpu_custom_call.1} parent=5 // pred_check_branch
        %171 = sbr.rel (%p168) target = $region12
      $region11: #{tpu_custom_call.1} parent=5 // pred_region
        %s172 = ssub.s32 %s17, 1
        // Predicated region
        $region13: #{tpu_custom_call.1} parent=11 // pred_check
          %p173 = pneg %p130
        $region14: #{tpu_custom_call.1} parent=11 // pred_check_branch
          %175 = sbr.rel (%p173) target = $region16
        $region15: #{tpu_custom_call.1} parent=11 // pred_region
          %s177 = ssub.s32 512, 512
          %178 = vsyncadd [#allocation6], %s177
          %s179 = sshll.u32 [#allocation5], 4
          %s180 = int_to_ptr.vmem [resolvable:$true] %s179
          %185 = dma.hbm_to_vmem [thread:$0]  %s3, 512, %s180, [#allocation6], 128, 128, 8
        $region16: #{tpu_custom_call.1} parent=11 // pred_fallthru
          _
      $region12: #{tpu_custom_call.1} parent=5 // pred_fallthru
        _
      %p186 = scmp.lt.s32.totalorder %s17, 2
      // Predicated region
      $region17: #{tpu_custom_call.1} parent=5 // pred_check
        %p187 = pneg %p186
      $region18: #{tpu_custom_call.1} parent=5 // pred_check_branch
        %189 = sbr.rel (%p187) target = $region20
      $region19: #{tpu_custom_call.1} parent=5 // pred_region
        // Predicated region
        $region21: #{tpu_custom_call.1} parent=19 // pred_check
          %p190 = pneg %p51
        $region22: #{tpu_custom_call.1} parent=19 // pred_check_branch
          %192 = sbr.rel (%p190) target = $region24
        $region23: #{tpu_custom_call.1} parent=19 // pred_region
          %s193 = sand.u32 %s41, 1
          %s194 = scalar_lea.sflag [#allocation3], %s193
          %s195 = sand.u32 %s41, 1
          %s196 = smul.addr %s195, 16
          %s197 = scalar_lea.vmem [#allocation2], %s196
          %s198 = smul.u32 2, %s25
          %s200 = ssub.s32 256, 256
          %201 = vsyncadd %s194, %s200
          %s202 = smul.addr %s24, 2
          %s203 = sadd.s32 %s198, %s202
          %s204 = smul.addr %s203, 128
          %s205 = scalar_lea.hbm %s0, %s204
          %s206 = sshll.u32 %s197, 4
          %s207 = int_to_ptr.vmem [resolvable:$true] %s206
          %212 = dma.hbm_to_vmem [thread:$0]  %s205, 256, %s207, %s194, 128, 128, 8
        $region24: #{tpu_custom_call.1} parent=19 // pred_fallthru
          _
        // Predicated region
        $region25: #{tpu_custom_call.1} parent=19 // pred_check
          %p213 = pneg %p77
        $region26: #{tpu_custom_call.1} parent=19 // pred_check_branch
          %215 = sbr.rel (%p213) target = $region28
        $region27: #{tpu_custom_call.1} parent=19 // pred_region
          %p216 = scmp.lt.s32.totalorder %s24, 1
          %s217 = scalar_select %p216, %s24, 1
          %s218 = scalar_lea.vmem %s1, %s217
        $region28: #{tpu_custom_call.1} parent=19 // pred_fallthru
          _
        // Predicated region
        $region29: #{tpu_custom_call.1} parent=19 // pred_check
          %p219 = pneg %p103
        $region30: #{tpu_custom_call.1} parent=19 // pred_check_branch
          %221 = sbr.rel (%p219) target = $region32
        $region31: #{tpu_custom_call.1} parent=19 // pred_region
          %p222 = scmp.lt.s32.totalorder %s24, 1
          %s223 = scalar_select %p222, %s24, 1
          %s224 = scalar_lea.vmem %s2, %s223
        $region32: #{tpu_custom_call.1} parent=19 // pred_fallthru
          _
      $region20: #{tpu_custom_call.1} parent=5 // pred_fallthru
        _
      %p225 = scmp.le.s32.totalorder 1, %s17
      %p226 = scmp.lt.s32.totalorder %s17, 3
      %p227 = pnand %p225, %p226
      %p228 = pneg %p227
      // Predicated region
      $region33: #{tpu_custom_call.1} parent=5 // pred_check
        _
      $region34: #{tpu_custom_call.1} parent=5 // pred_check_branch
        %230 = sbr.rel (%p227) target = $region36
      $region35: #{tpu_custom_call.1} parent=5 // pred_region
        %s231 = ssub.s32 %s17, 1
        %s232 = sand.u32 %s44, 1
        %s233 = scalar_lea.sflag [#allocation3], %s232
        %s234 = sand.u32 %s44, 1
        %s235 = smul.addr %s234, 16
        %s236 = scalar_lea.vmem [#allocation2], %s235
        // Predicated region
        $region37: #{tpu_custom_call.1} parent=35 // pred_check
          %p237 = pneg %p57
        $region38: #{tpu_custom_call.1} parent=35 // pred_check_branch
          %239 = sbr.rel (%p237) target = $region40
        $region39: #{tpu_custom_call.1} parent=35 // pred_region
          %240 = dma.done %s233, 256
        $region40: #{tpu_custom_call.1} parent=35 // pred_fallthru
          _
        // Predicated region
        $region41: #{tpu_custom_call.1} parent=35 // pred_check
          %p241 = pneg %p130
        $region42: #{tpu_custom_call.1} parent=35 // pred_check_branch
          %243 = sbr.rel (%p241) target = $region44
        $region43: #{tpu_custom_call.1} parent=35 // pred_region
          %244 = dma.done [#allocation6], 512
        $region44: #{tpu_custom_call.1} parent=35 // pred_fallthru
          _
        %s245 = sand.u32 %s44, 1
        %s246 = scalar_lea.sflag [#allocation3], %s245
        %s247 = sand.u32 %s44, 1
        %s248 = smul.addr %s247, 16
        %s249 = scalar_lea.vmem [#allocation2], %s248
        %p250 = pneg %p57
        %p251 = pneg %p54
        %p252 = scmp.lt.s32.totalorder %s26, 1
        %s253 = scalar_select %p252, %s26, 1
        %s254 = scalar_lea.vmem %s1, %s253
        %p255 = pneg %p83
        %p256 = pneg %p80
        %p257 = scmp.lt.s32.totalorder %s26, 1
        %s258 = scalar_select %p257, %s26, 1
        %s259 = scalar_lea.vmem %s2, %s258
        %p260 = pneg %p109
        %p261 = pneg %p106
        %p262 = pneg %p130
        %p263 = pneg %p127
        %p264 = pneg %p158
        %p265 = pneg %p155
        %s266 = sand.u32 %s145, 1
        %s267 = scalar_lea.sflag [#allocation4], %s266
        %s268 = sand.u32 %s145, 1
        %s269 = smul.addr %s268, 16
        %s270 = scalar_lea.vmem [#allocation7], %s269
        %s271 = smul.u32 2, %s27
        %p272 = scmp.lt.s32.totalorder %s26, 1
        %s273 = scalar_select %p272, %s26, 1
        %s274 = scalar_lea.vmem %s1, %s273
        %p275 = scmp.lt.s32.totalorder %s26, 1
        %s276 = scalar_select %p275, %s26, 1
        %s277 = scalar_lea.vmem %s2, %s276
        %s278 = smul.u32 2, %s27
        %v279 = vld [vmem:[%s236] sm:$0xff]
        %v280 = vld [vmem:[%s236 + $0x8] sm:$0xff]
        %v281 = vld [vmem:[#allocation5] sm:$0xff]
        %v282 = vld [vmem:[#allocation5 + $0x8] sm:$0xff]
        %v283 = vld [vmem:[#allocation5 + $0x10] sm:$0xff]
        %v284 = vld [vmem:[#allocation5 + $0x18] sm:$0xff]
        %v285 = vld [vmem:[%s274] sm:$0x1]
        %v287 = vlaneseq
        %v288 = vshrl.u32 %v287, 7
        %v289 = vsub.s32 0, %v288
        %v290 = vrot.slane %v285, %v289
        %vm292 = vcmask 261120
        %v294 = vsel %vm292, %v279, 0
        %v297 = vsel %vm292, %v280, 0
        %299 = vmatprep.subr.mxu0 0.0
        %300 = vmatpush1.msra.mxu0 %v281
        %301 = vmatprep.subr.mxu0 0.0
        %302 = vmatpush1.msra.mxu0 %v282
        %303 = vmatprep.subr.mxu0 0.0
        %304 = vmatpush1.msra.mxu0 %v283
        %305 = vmatprep.subr.mxu0 0.0
        %306 = vmatpush1.msra.mxu0 %v284
        %307 = vmatprep.subr.mxu0 0.0
        %308 = vmatpush1.msra.mxu0 0.0
        %309 = vmatprep.subr.mxu0 0.0
        %310 = vmatpush1.msra.mxu0 0.0
        %311 = vmatprep.subr.mxu0 0.0
        %312 = vmatpush1.msra.mxu0 0.0
        %313 = vmatprep.subr.mxu0 0.0
        %314 = vmatpush1.msra.mxu0 0.0
        %315 = vmatprep.subr.mxu0 0.0
        %316 = vmatpush1.msra.mxu0 0.0
        %317 = vmatprep.subr.mxu0 0.0
        %318 = vmatpush1.msra.mxu0 0.0
        %319 = vmatprep.subr.mxu0 0.0
        %320 = vmatpush1.msra.mxu0 0.0
        %321 = vmatprep.subr.mxu0 0.0
        %322 = vmatpush1.msra.mxu0 0.0
        %323 = vmatprep.subr.mxu0 0.0
        %324 = vmatpush1.msra.mxu0 0.0
        %325 = vmatprep.subr.mxu0 0.0
        %326 = vmatpush1.msra.mxu0 0.0
        %327 = vmatprep.subr.mxu0 0.0
        %328 = vmatpush1.msra.mxu0 0.0
        %329 = vmatprep.subr.mxu0 0.0
        %330 = vmatpush1.msra.mxu0 0.0
        %331 = vmatprep.subr.mxu0 0.0
        %332 = vmatpush1.msra.mxu0 0.0
        %333 = vmatprep.subr.mxu0 0.0
        %334 = vmatpush1.msra.mxu0 0.0
        %335 = vmatprep.subr.mxu0 0.0
        %336 = vmatpush1.msra.mxu0 0.0
        %337 = vmatprep.subr.mxu0 0.0
        %338 = vmatpush1.msra.mxu0 0.0
        %339 = vmatprep.subr.mxu0 0.0
        %340 = vmatpush1.msra.mxu0 0.0
        %341 = vmatprep.subr.mxu0 0.0
        %342 = vmatpush1.msra.mxu0 0.0
        %343 = vmatprep.subr.mxu0 0.0
        %344 = vmatpush1.msra.mxu0 0.0
        %345 = vmatprep.subr.mxu0 0.0
        %346 = vmatpush1.msra.mxu0 0.0
        %347 = vmatprep.subr.mxu0 0.0
        %348 = vmatpush1.msra.mxu0 0.0
        %349 = vmatprep.subr.mxu0 0.0
        %350 = vmatpush1.msra.mxu0 0.0
        %351 = vmatprep.subr.mxu0 0.0
        %352 = vmatpush1.msra.mxu0 0.0
        %353 = vmatprep.subr.mxu0 0.0
        %354 = vmatpush1.msra.mxu0 0.0
        %355 = vmatprep.subr.mxu0 0.0
        %356 = vmatpush1.msra.mxu0 0.0
        %357 = vmatprep.subr.mxu0 0.0
        %358 = vmatpush1.msra.mxu0 0.0
        %359 = vmatprep.subr.mxu0 0.0
        %360 = vmatpush1.msra.mxu0 0.0
        %361 = vmatprep.subr.mxu0 0.0
        %362 = vmatpush1.msra.mxu0 0.0
        %363 = vmatprep.mubr.f32.mxu0 0.0
        %364 = vmatmul.mubr.f32.gmra.mrb[0].mxu0 %v294
        %v365 = vpop.f32.mrb[0].mxu0
        %v366 = vadd.f32 %v290, %v365
        %v367 = vpop.f32.mrb[0].mxu0
        %368 = vmatprep.mubr.f32.mxu0 0.0
        %369 = vmatmul.mubr.f32.gmra.mrb[0].mxu0 %v297
        %v370 = vpop.f32.mrb[0].mxu0
        %v371 = vadd.f32 %v290, %v370
        %v372 = vpop.f32.mrb[0].mxu0
        %373 = vdwg.mxu0
        %v374 = vtanh.pop %v366
        %v375 = vtanh.pop %v371
        %v376 = vmul.f32 %v374, 0.5
        %v377 = vmul.f32 %v375, 0.5
        %v378 = vtanh.pop %v376
        %v379 = vtanh.pop %v377
        %v380 = vadd.f32 %v378, 1.0
        %v381 = vadd.f32 %v379, 1.0
        %v382 = vmul.f32 %v380, 0.5
        %v383 = vmul.f32 %v381, 0.5
        %v384 = vmul.f32 %v382, %v279
        %v385 = vmul.f32 %v383, %v280
        %386 = vst.msk [vmem:[%s270] sm:$0xff] %vm292, %v382
        %387 = vst.msk [vmem:[%s270 + $0x8] sm:$0xff] %vm292, %v383
        %390 = vrot.lane.b32.xlu0 %v384, 32
        %v391 = vpop.permute.xlu0 %390
        %392 = vrot.lane.b32.xlu0 %v385, 32
        %v393 = vpop.permute.xlu0 %392
        %vm396 = vcmask 523520
        %397 = vst.msk [vmem:[%s270] sm:$0xff] %vm396, %v391
        %398 = vst.msk [vmem:[%s270 + $0x8] sm:$0xff] %vm396, %v393
        %v399 = vld [vmem:[%s277] sm:$0x1]
        %v401 = vlaneseq
        %v402 = vshrl.u32 %v401, 7
        %v403 = vsub.s32 0, %v402
        %v404 = vrot.slane %v399, %v403
        %v406 = vadd.f32 %v384, %v404
        %v407 = vadd.f32 %v385, %v404
        %410 = vrot.lane.b32.xlu0 %v406, 64
        %v411 = vpop.permute.xlu0 %410
        %412 = vrot.lane.b32.xlu0 %v407, 64
        %v413 = vpop.permute.xlu0 %412
        %vm416 = vcmask 785920
        %417 = vst.msk [vmem:[%s270] sm:$0xff] %vm416, %v411
        %418 = vst.msk [vmem:[%s270 + $0x8] sm:$0xff] %vm416, %v413
        %s419 = sand.u32 %s145, 1
        %s420 = scalar_lea.sflag [#allocation4], %s419
        %s421 = sand.u32 %s145, 1
        %s422 = smul.addr %s421, 16
        %s423 = scalar_lea.vmem [#allocation7], %s422
        // Predicated region
        $region45: #{tpu_custom_call.1} parent=35 // pred_check
          %p424 = pneg %p155
        $region46: #{tpu_custom_call.1} parent=35 // pred_check_branch
          %426 = sbr.rel (%p424) target = $region48
        $region47: #{tpu_custom_call.1} parent=35 // pred_region
          %s427 = smul.u32 2, %s27
          %s429 = ssub.s32 256, 256
          %430 = vsyncadd %s420, %s429
          %s431 = smul.addr %s26, 2
          %s432 = sadd.s32 %s427, %s431
          %s433 = smul.addr %s432, 128
          %s434 = scalar_lea.hbm %s4, %s433
          %s435 = sshll.u32 %s423, 4
          %s436 = int_to_ptr.vmem [resolvable:$true] %s435
          %441 = dma.vmem_to_hbm [thread:$0]  %s436, 256, %s434, %s420, 128, 128, 8
        $region48: #{tpu_custom_call.1} parent=35 // pred_fallthru
          _
      $region36: #{tpu_custom_call.1} parent=5 // pred_fallthru
        _
      %p442 = scmp.le.s32.totalorder 2, %s17
      // Predicated region
      $region49: #{tpu_custom_call.1} parent=5 // pred_check
        %p443 = pneg %p442
      $region50: #{tpu_custom_call.1} parent=5 // pred_check_branch
        %445 = sbr.rel (%p443) target = $region52
      $region51: #{tpu_custom_call.1} parent=5 // pred_region
        %s446 = ssub.s32 %s17, 2
        // Predicated region
        $region53: #{tpu_custom_call.1} parent=51 // pred_check
          %p447 = pneg %p161
        $region54: #{tpu_custom_call.1} parent=51 // pred_check_branch
          %449 = sbr.rel (%p447) target = $region56
        $region55: #{tpu_custom_call.1} parent=51 // pred_region
          %s450 = sand.u32 %s146, 1
          %s451 = scalar_lea.sflag [#allocation4], %s450
          %s452 = sand.u32 %s146, 1
          %s453 = smul.addr %s452, 16
          %s454 = scalar_lea.vmem [#allocation7], %s453
          %455 = dma.done %s451, 256
        $region56: #{tpu_custom_call.1} parent=51 // pred_fallthru
          _
      $region52: #{tpu_custom_call.1} parent=5 // pred_fallthru
        _
    $region6: #{tpu_custom_call.1} parent=1 // loop_footer
      %s21 = sadd.s32 1, %s17
    $region7: #{tpu_custom_call.1} parent=1 // loop_footer_branch
      %16 = sbr.rel target = $region3
    $region8: #{tpu_custom_call.1} parent=1 // loop_exit
      _
    %456 = vsyncpa [#allocation3], 1
    %s457 = scalar_lea.sflag [#allocation3], 1
    %458 = vsyncpa %s457, 1
    %459 = vsyncpa [#allocation6], 1
    %460 = vsyncpa [#allocation4], 1
    %s461 = scalar_lea.sflag [#allocation4], 1
    %462 = vsyncpa %s461, 1

</llo_original>
